<compile_context>
chip_gen: v7x
topology: tpu7x:2x2x1
jax: 0.10.0
libtpu: 0.0.40
codegen_flags: <defaults>
</compile_context>

<pallas_src>
import functools

import jax
import jax.numpy as jnp
from jax.experimental import pallas as pl
from jax.experimental.pallas import tpu as pltpu


# ----------------------------- kernel body ---------------------------------

def classifier_scale_kernel(x_ref, w1_ref, bn_bias_ref, w2_ref, b2_ref, o_ref):
    # lin1 with the BN (eval) scale pre-folded into w1's columns:
    #   (tb, F) @ (F, I_pad) -> (tb, I_pad), f32 accumulation.
    h = jnp.dot(x_ref[...], w1_ref[...], preferred_element_type=jnp.float32)
    # BN (eval) shift.
    h = h + bn_bias_ref[...]
    # Polynome_ACT minus its 0.47 constant (folded into b2 in prepare()):
    #   0.5*h + 0.09*h^2 == h * (0.5 + 0.09*h)
    p = h * (0.5 + 0.09 * h)
    # lin2: (tb, I_pad) @ (I_pad, O) + (1, O), f32 accumulation.
    out = jnp.dot(p.astype(w2_ref.dtype), w2_ref[...],
                  preferred_element_type=jnp.float32) + b2_ref[...]
    o_ref[...] = out.astype(o_ref.dtype)


# --------------------------- helpers / params -------------------------------

def _round_up(n, m):
    return ((n + m - 1) // m) * m


def _two_tensorcores():
    """Best-effort detection of a 2-TensorCore part (v7x)."""
    try:
        return "v7" in jax.devices()[0].device_kind.lower()
    except Exception:  # pragma: no cover
        return False


def _pick_tb(B, tb_max, two_cores):
    """Batch tile: big (fills MXU M, amortizes ~0.35us/step), multiple of 8.

    Single-TC parts (v5e/v6e): one grid step whenever B <= tb_max (the grid is
    a serial loop there, extra steps are pure overhead).  2-TC parts (v7x):
    >= 2 steps for B >= 16, and an even step count for large B.
    """
    B = max(B, 1)
    if B <= tb_max:
        if two_cores and B >= 16:
            return _round_up((B + 1) // 2, 8)
        return _round_up(B, 8)
    tb = tb_max
    if two_cores:
        steps = -(-B // tb)
        if steps % 2:
            steps += 1
            tb = _round_up(-(-B // steps), 8)
    return tb


def prepare_classifier_scale_params(w1, gamma, beta, running_mean, running_var,
                                    w2, b2, eps=1e-5,
                                    operand_dtype=jnp.bfloat16):
    """Fold BN + the 0.47 polynomial constant into the weights, pad, cast.

    Call ONCE per set of parameters (static), not per forward call.

    w1: (fcsize, inter)  w2: (inter, 1000)  b2: (1000,)   -- pre-transposed.
    Returns (w1_p, bn_bias_p, w2_p, b2_p) ready for classifier_scale_apply.
    """
    f32 = jnp.float32
    F, I = w1.shape
    O = w2.shape[1]
    I_pad = _round_up(I, 128)

    inv_std = 1.0 / jnp.sqrt(running_var.astype(f32) + eps)
    bn_scale = gamma.astype(f32) * inv_std                              # (I,)
    w1_folded = w1.astype(f32) * bn_scale[None, :]                      # scale -> w1 cols
    bn_bias = beta.astype(f32) - running_mean.astype(f32) * bn_scale    # (I,)
    b2_folded = b2.astype(f32) + 0.47 * jnp.sum(w2.astype(f32), axis=0)  # 0.47 * ones @ w2

    w1_p = jnp.pad(w1_folded, ((0, 0), (0, I_pad - I))).astype(operand_dtype)
    bn_bias_p = jnp.pad(bn_bias, (0, I_pad - I)).reshape(1, I_pad).astype(f32)
    w2_p = jnp.pad(w2.astype(f32), ((0, I_pad - I), (0, 0))).astype(operand_dtype)
    b2_p = b2_folded.reshape(1, O).astype(f32)
    return w1_p, bn_bias_p, w2_p, b2_p


# ------------------------------ hot path ------------------------------------

def classifier_scale_apply(x, w1_p, bn_bias_p, w2_p, b2_p, *,
                           tb_max=512, two_cores=None):
    """Forward pass using pre-prepared (folded/padded/cast) parameters."""
    f32 = jnp.float32
    B, F = x.shape
    I_pad = w1_p.shape[1]
    O = w2_p.shape[1]
    operand_dtype = w1_p.dtype
    if two_cores is None:
        two_cores = _two_tensorcores()

    tb = _pick_tb(B, tb_max, two_cores)
    B_pad = _round_up(B, tb)

    x_p = x.astype(operand_dtype)
    if B_pad != B:
        x_p = jnp.pad(x_p, ((0, B_pad - B), (0, 0)))

    grid = (B_pad // tb,)
    itemsize = jnp.dtype(operand_dtype).itemsize
    cost = pl.CostEstimate(
        flops=2 * B_pad * (F * I_pad + I_pad * O),
        transcendentals=0,
        bytes_accessed=(B_pad * F * itemsize            # x
                        + F * I_pad * itemsize          # w1
                        + I_pad * O * itemsize          # w2
                        + (I_pad + O) * 4               # biases
                        + B_pad * O * 4),               # output
    )

    out = pl.pallas_call(
        classifier_scale_kernel,
        out_shape=jax.ShapeDtypeStruct((B_pad, O), f32),
        grid=grid,
        in_specs=[
            pl.BlockSpec((tb, F), lambda i: (i, 0)),        # x tile over batch
            pl.BlockSpec((F, I_pad), lambda i: (0, 0)),     # w1 (BN-folded, resident)
            pl.BlockSpec((1, I_pad), lambda i: (0, 0)),     # bn bias
            pl.BlockSpec((I_pad, O), lambda i: (0, 0)),     # w2 (resident)
            pl.BlockSpec((1, O), lambda i: (0, 0)),         # b2 (+0.47*sum(w2))
        ],
        # Last dim O=1000 equals the full array dim -> legal full-extent block;
        # avoids the post-kernel column-slice copy entirely.
        out_specs=pl.BlockSpec((tb, O), lambda i: (i, 0)),
        compiler_params=pltpu.CompilerParams(
            dimension_semantics=("parallel",)),
        cost_estimate=cost,
    )(x_p, w1_p, bn_bias_p, w2_p, b2_p)

    if B_pad != B:
        out = out[:B]
    return out


def classifier_scale(x, w1, gamma, beta, running_mean, running_var, w2, b2,
                     eps=1e-5, tb_max=512, operand_dtype=jnp.bfloat16):
    """One-shot convenience wrapper (prepare + apply).

    For repeated inference, call prepare_classifier_scale_params() once and
    classifier_scale_apply() per batch -- the folding/padding glue is as
    expensive as the kernel itself in this memory-bound regime.
    """
    params = prepare_classifier_scale_params(
        w1, gamma, beta, running_mean, running_var, w2, b2,
        eps=eps, operand_dtype=operand_dtype)
    return classifier_scale_apply(x, *params, tb_max=tb_max)


# ------------------------------ reference -----------------------------------

def reference(x, w1, gamma, beta, running_mean, running_var, w2, b2, eps=1e-5):
    h = x @ w1
    h = (h - running_mean) / jnp.sqrt(running_var + eps) * gamma + beta
    h = 0.47 + 0.5 * h + 0.09 * h * h
    return h @ w2 + b2


if __name__ == "__main__":
    # Small shapes consistent with the module: fcsize=32, inter=128,
    # out=1000 (hardcoded in lin2), batch=64.
    B, FCSIZE, INTER, OUT = 64, 32, 128, 1000

    key = jax.random.PRNGKey(0)
    kx, kw1, kw2, kb2, kg, kb, km, kv = jax.random.split(key, 8)

    x = jax.random.normal(kx, (B, FCSIZE), dtype=jnp.float32)
    # Deterministic parameter init (synthetic, not a checkpoint load).
    w1 = jax.random.normal(kw1, (FCSIZE, INTER), dtype=jnp.float32) * 0.05
    w2 = jax.random.normal(kw2, (INTER, OUT), dtype=jnp.float32) * 0.05
    b2 = jax.random.normal(kb2, (OUT,), dtype=jnp.float32) * 0.1
    gamma = 1.0 + 0.1 * jax.random.normal(kg, (INTER,), dtype=jnp.float32)
    beta = 0.1 * jax.random.normal(kb, (INTER,), dtype=jnp.float32)
    running_mean = 0.1 * jax.random.normal(km, (INTER,), dtype=jnp.float32)
    running_var = jax.random.uniform(kv, (INTER,), dtype=jnp.float32,
                                     minval=0.5, maxval=1.5)

    ref = reference(x, w1, gamma, beta, running_mean, running_var, w2, b2)

    # ---- f32 operand path: tight tolerance --------------------------------
    params_f32 = prepare_classifier_scale_params(
        w1, gamma, beta, running_mean, running_var, w2, b2,
        operand_dtype=jnp.float32)
    apply_f32 = jax.jit(functools.partial(classifier_scale_apply,
                                          two_cores=_two_tensorcores()))
    out_f32 = jax.block_until_ready(apply_f32(x, *params_f32))
    assert out_f32.shape == (B, OUT)
    assert jnp.allclose(out_f32, ref, atol=1e-4, rtol=1e-4), "f32 mismatch vs reference"

    # ---- bf16 operand path (default; MXU fast path): looser tolerance -----
    params_bf16 = prepare_classifier_scale_params(
        w1, gamma, beta, running_mean, running_var, w2, b2,
        operand_dtype=jnp.bfloat16)
    out_bf16 = jax.block_until_ready(apply_f32(x, *params_bf16))
    assert out_bf16.shape == (B, OUT)
    assert jnp.allclose(out_bf16, ref, atol=5e-2, rtol=5e-2), "bf16 mismatch vs reference"

    # One-shot convenience wrapper also works.
    out_once = jax.block_until_ready(
        classifier_scale(x, w1, gamma, beta, running_mean, running_var, w2, b2))
    assert out_once.shape == (B, OUT)

    print("KERNEL_OK")
</pallas_src>

<mosaic_0001>
module attributes {stable_mosaic.version = 11 : i64} {
  func.func @classifier_scale_kernel(%arg0: i32, %arg1: memref<64x32xf32, #tpu.memory_space<vmem>>, %arg2: memref<32x128xf32, #tpu.memory_space<vmem>>, %arg3: memref<1x128xf32, #tpu.memory_space<vmem>>, %arg4: memref<128x1000xf32, #tpu.memory_space<vmem>>, %arg5: memref<1x1000xf32, #tpu.memory_space<vmem>>, %arg6: memref<64x1000xf32, #tpu.memory_space<vmem>>) attributes {dimension_semantics = [#tpu.dimension_semantics<parallel>], iteration_bounds = array<i64: 1>, scalar_prefetch = 0 : i64, scratch_operands = 0 : i64, tpu.core_type = #tpu.core_type<tc>, window_params = [{transform_indices = @transform_0, window_bounds = array<i64: 64, 32>}, {pipeline_mode = #tpu.pipeline_mode<synchronous>, transform_indices = @transform_1, window_bounds = array<i64: 32, 128>}, {pipeline_mode = #tpu.pipeline_mode<synchronous>, transform_indices = @transform_2, window_bounds = array<i64: 1, 128>}, {pipeline_mode = #tpu.pipeline_mode<synchronous>, transform_indices = @transform_3, window_bounds = array<i64: 128, 1000>}, {pipeline_mode = #tpu.pipeline_mode<synchronous>, transform_indices = @transform_4, window_bounds = array<i64: 1, 1000>}, {transform_indices = @transform_5, window_bounds = array<i64: 64, 1000>}]} {
    %c0 = arith.constant 0 : index
    %c0_0 = arith.constant 0 : index
    %0 = vector.load %arg1[%c0, %c0_0] : memref<64x32xf32, #tpu.memory_space<vmem>>, vector<64x32xf32>
    %c0_1 = arith.constant 0 : index
    %c0_2 = arith.constant 0 : index
    %1 = vector.load %arg2[%c0_1, %c0_2] : memref<32x128xf32, #tpu.memory_space<vmem>>, vector<32x128xf32>
    %cst = arith.constant dense<0.000000e+00> : vector<64x128xf32>
    %2 = tpu.matmul %0, %1, %cst {dimension_numbers = #tpu.dot_dimension_numbers<[1], [0], [0], [1], [0, 0, 1, 1], [], []>} : vector<64x32xf32>, vector<32x128xf32>, vector<64x128xf32> -> vector<64x128xf32>
    %c0_3 = arith.constant 0 : index
    %c0_4 = arith.constant 0 : index
    %3 = vector.load %arg3[%c0_3, %c0_4] : memref<1x128xf32, #tpu.memory_space<vmem>>, vector<1x128xf32>
    %4 = vector.broadcast %3 : vector<1x128xf32> to vector<64x128xf32>
    %5 = arith.addf %2, %4 : vector<64x128xf32>
    %cst_5 = arith.constant 9.000000e-02 : f32
    %6 = vector.broadcast %cst_5 : f32 to vector<64x128xf32>
    %7 = arith.mulf %6, %5 : vector<64x128xf32>
    %cst_6 = arith.constant 5.000000e-01 : f32
    %8 = vector.broadcast %cst_6 : f32 to vector<64x128xf32>
    %9 = arith.addf %8, %7 : vector<64x128xf32>
    %10 = arith.mulf %5, %9 : vector<64x128xf32>
    %c0_7 = arith.constant 0 : index
    %c0_8 = arith.constant 0 : index
    %11 = vector.load %arg4[%c0_7, %c0_8] : memref<128x1000xf32, #tpu.memory_space<vmem>>, vector<128x1000xf32>
    %cst_9 = arith.constant dense<0.000000e+00> : vector<64x1000xf32>
    %12 = tpu.matmul %10, %11, %cst_9 {dimension_numbers = #tpu.dot_dimension_numbers<[1], [0], [0], [1], [0, 0, 1, 1], [], []>} : vector<64x128xf32>, vector<128x1000xf32>, vector<64x1000xf32> -> vector<64x1000xf32>
    %c0_10 = arith.constant 0 : index
    %c0_11 = arith.constant 0 : index
    %13 = vector.load %arg5[%c0_10, %c0_11] : memref<1x1000xf32, #tpu.memory_space<vmem>>, vector<1x1000xf32>
    %14 = vector.broadcast %13 : vector<1x1000xf32> to vector<64x1000xf32>
    %15 = arith.addf %12, %14 : vector<64x1000xf32>
    %c0_12 = arith.constant 0 : index
    %c0_13 = arith.constant 0 : index
    %16 = vector.load %arg6[%c0_12, %c0_13] : memref<64x1000xf32, #tpu.memory_space<vmem>>, vector<64x1000xf32>
    tpu.vector_store %arg6[%c0_12, %c0_13], %15 {strides = array<i32>} : memref<64x1000xf32, #tpu.memory_space<vmem>>, vector<64x1000xf32>,
    return
  }
  func.func @transform_0(%arg0: i32) -> (i32, i32) {
    %c0_i32 = arith.constant 0 : i32
    %c0_i32_0 = arith.constant 0 : i32
    return %arg0, %c0_i32 : i32, i32
  }
  func.func @transform_1(%arg0: i32) -> (i32, i32) {
    %c0_i32 = arith.constant 0 : i32
    %c0_i32_0 = arith.constant 0 : i32
    %c0_i32_1 = arith.constant 0 : i32
    return %c0_i32, %c0_i32_0 : i32, i32
  }
  func.func @transform_2(%arg0: i32) -> (i32, i32) {
    %c0_i32 = arith.constant 0 : i32
    %c0_i32_0 = arith.constant 0 : i32
    %c0_i32_1 = arith.constant 0 : i32
    return %c0_i32, %c0_i32_0 : i32, i32
  }
  func.func @transform_3(%arg0: i32) -> (i32, i32) {
    %c0_i32 = arith.constant 0 : i32
    %c0_i32_0 = arith.constant 0 : i32
    %c0_i32_1 = arith.constant 0 : i32
    return %c0_i32, %c0_i32_0 : i32, i32
  }
  func.func @transform_4(%arg0: i32) -> (i32, i32) {
    %c0_i32 = arith.constant 0 : i32
    %c0_i32_0 = arith.constant 0 : i32
    %c0_i32_1 = arith.constant 0 : i32
    return %c0_i32, %c0_i32_0 : i32, i32
  }
  func.func @transform_5(%arg0: i32) -> (i32, i32) {
    %c0_i32 = arith.constant 0 : i32
    %c0_i32_0 = arith.constant 0 : i32
    return %arg0, %c0_i32 : i32, i32
  }
}

</mosaic_0001>

<llo_original>
// kernel: classifier_scale_apply.1
$region0: #{classifier_scale_apply.1}
  #allocation0 [shape = 'u32[]', space=smem, size = 0x4, offset = 0x4, fixed_abs, tag = 'smem constant byte address 0x4 - core index']
  #allocation1 [shape = 'u32[144,128]{1,0:T(1,128)}', space=vmem, size = 0x12000, scoped, tag = 'internal scratch']
  %s0 = inlined_call_operand.vmem [shape: f32[64,32], index: 0, kind: input, shape index: {}]
  %s1 = inlined_call_operand.vmem [shape: f32[32,128], index: 1, kind: input, shape index: {}]
  %s2 = inlined_call_operand.vmem [shape: f32[1,128], index: 2, kind: input, shape index: {}]
  %s3 = inlined_call_operand.vmem [shape: f32[128,1000], index: 3, kind: input, shape index: {}]
  %s4 = inlined_call_operand.vmem [shape: f32[1,1000], index: 4, kind: input, shape index: {}]
  %s5 = inlined_call_operand.hbm [shape: f32[64,1000], index: 5, kind: output, shape index: {}]
  %s6 = sld [smem:[#allocation0]]
  $region30: #{classifier_scale_apply.1} parent=0
    _
  %s8 = ssub.s32 1, %s6
  %s9 = scalar_select 0, %s8, %s6
  $region1: #{classifier_scale_apply.1} parent=0
    #allocation2 [shape = 'u8[262144]{0}', space=vmem, size = 0x40000, scoped, tag = 'output window, operand 0, single buffered']
    #allocation3 [shape = 's32[1]{0}', space=sflag, size = 0x4, scoped, tag = 'scoped memory for classifier_scale_apply.1']
    %10 = vsyncpa [#allocation3], 0
    // Predicated region
    $region2: #{classifier_scale_apply.1} parent=1 // pred_check
      _
    $region3: #{classifier_scale_apply.1} parent=1 // pred_check_branch
      %12 = sbr.rel (0) target = $region5
    $region4: #{classifier_scale_apply.1} parent=1 // pred_region
      _
    $region5: #{classifier_scale_apply.1} parent=1 // pred_fallthru
      _
    // Predicated region
    $region6: #{classifier_scale_apply.1} parent=1 // pred_check
      _
    $region7: #{classifier_scale_apply.1} parent=1 // pred_check_branch
      %14 = sbr.rel (0) target = $region9
    $region8: #{classifier_scale_apply.1} parent=1 // pred_region
      _
    $region9: #{classifier_scale_apply.1} parent=1 // pred_fallthru
      _
    // Predicated region
    $region10: #{classifier_scale_apply.1} parent=1 // pred_check
      _
    $region11: #{classifier_scale_apply.1} parent=1 // pred_check_branch
      %16 = sbr.rel (0) target = $region13
    $region12: #{classifier_scale_apply.1} parent=1 // pred_region
      _
    $region13: #{classifier_scale_apply.1} parent=1 // pred_fallthru
      _
    // Predicated region
    $region14: #{classifier_scale_apply.1} parent=1 // pred_check
      _
    $region15: #{classifier_scale_apply.1} parent=1 // pred_check_branch
      %18 = sbr.rel (0) target = $region17
    $region16: #{classifier_scale_apply.1} parent=1 // pred_region
      _
    $region17: #{classifier_scale_apply.1} parent=1 // pred_fallthru
      _
    // Predicated region
    $region18: #{classifier_scale_apply.1} parent=1 // pred_check
      _
    $region19: #{classifier_scale_apply.1} parent=1 // pred_check_branch
      %20 = sbr.rel (0) target = $region21
    $region20: #{classifier_scale_apply.1} parent=1 // pred_region
      _
    $region21: #{classifier_scale_apply.1} parent=1 // pred_fallthru
      _
    %v21 = vld [vmem:[%s0] sm:$0xff]
    %v22 = vld [vmem:[%s0 + $0x8] sm:$0xff]
    %v23 = vld [vmem:[%s0 + $0x10] sm:$0xff]
    %v24 = vld [vmem:[%s0 + $0x18] sm:$0xff]
    %v25 = vld [vmem:[%s0 + $0x20] sm:$0xff]
    %v26 = vld [vmem:[%s0 + $0x28] sm:$0xff]
    %v27 = vld [vmem:[%s0 + $0x30] sm:$0xff]
    %v28 = vld [vmem:[%s0 + $0x38] sm:$0xff]
    %v29 = vld [vmem:[%s1] sm:$0xff]
    %v30 = vld [vmem:[%s1 + $0x8] sm:$0xff]
    %v31 = vld [vmem:[%s1 + $0x10] sm:$0xff]
    %v32 = vld [vmem:[%s1 + $0x18] sm:$0xff]
    %v33 = vld [vmem:[%s2] sm:$0x1]
    %v35 = vlaneseq
    %v36 = vshrl.u32 %v35, 7
    %v37 = vsub.s32 0, %v36
    %v38 = vrot.slane %v33, %v37
    %vm40 = vcmask 261120
    %v42 = vsel %vm40, %v21, 0
    %v45 = vsel %vm40, %v22, 0
    %v48 = vsel %vm40, %v23, 0
    %v51 = vsel %vm40, %v24, 0
    %v54 = vsel %vm40, %v25, 0
    %v57 = vsel %vm40, %v26, 0
    %v60 = vsel %vm40, %v27, 0
    %v63 = vsel %vm40, %v28, 0
    %65 = vmatprep.subr.mxu0 0.0
    %66 = vmatpush1.msra.mxu0 %v29
    %67 = vmatprep.subr.mxu0 0.0
    %68 = vmatpush1.msra.mxu0 %v30
    %69 = vmatprep.subr.mxu0 0.0
    %70 = vmatpush1.msra.mxu0 %v31
    %71 = vmatprep.subr.mxu0 0.0
    %72 = vmatpush1.msra.mxu0 %v32
    %73 = vmatprep.subr.mxu0 0.0
    %74 = vmatpush1.msra.mxu0 0.0
    %75 = vmatprep.subr.mxu0 0.0
    %76 = vmatpush1.msra.mxu0 0.0
    %77 = vmatprep.subr.mxu0 0.0
    %78 = vmatpush1.msra.mxu0 0.0
    %79 = vmatprep.subr.mxu0 0.0
    %80 = vmatpush1.msra.mxu0 0.0
    %81 = vmatprep.subr.mxu0 0.0
    %82 = vmatpush1.msra.mxu0 0.0
    %83 = vmatprep.subr.mxu0 0.0
    %84 = vmatpush1.msra.mxu0 0.0
    %85 = vmatprep.subr.mxu0 0.0
    %86 = vmatpush1.msra.mxu0 0.0
    %87 = vmatprep.subr.mxu0 0.0
    %88 = vmatpush1.msra.mxu0 0.0
    %89 = vmatprep.subr.mxu0 0.0
    %90 = vmatpush1.msra.mxu0 0.0
    %91 = vmatprep.subr.mxu0 0.0
    %92 = vmatpush1.msra.mxu0 0.0
    %93 = vmatprep.subr.mxu0 0.0
    %94 = vmatpush1.msra.mxu0 0.0
    %95 = vmatprep.subr.mxu0 0.0
    %96 = vmatpush1.msra.mxu0 0.0
    %97 = vmatprep.subr.mxu0 0.0
    %98 = vmatpush1.msra.mxu0 0.0
    %99 = vmatprep.subr.mxu0 0.0
    %100 = vmatpush1.msra.mxu0 0.0
    %101 = vmatprep.subr.mxu0 0.0
    %102 = vmatpush1.msra.mxu0 0.0
    %103 = vmatprep.subr.mxu0 0.0
    %104 = vmatpush1.msra.mxu0 0.0
    %105 = vmatprep.subr.mxu0 0.0
    %106 = vmatpush1.msra.mxu0 0.0
    %107 = vmatprep.subr.mxu0 0.0
    %108 = vmatpush1.msra.mxu0 0.0
    %109 = vmatprep.subr.mxu0 0.0
    %110 = vmatpush1.msra.mxu0 0.0
    %111 = vmatprep.subr.mxu0 0.0
    %112 = vmatpush1.msra.mxu0 0.0
    %113 = vmatprep.subr.mxu0 0.0
    %114 = vmatpush1.msra.mxu0 0.0
    %115 = vmatprep.subr.mxu0 0.0
    %116 = vmatpush1.msra.mxu0 0.0
    %117 = vmatprep.subr.mxu0 0.0
    %118 = vmatpush1.msra.mxu0 0.0
    %119 = vmatprep.subr.mxu0 0.0
    %120 = vmatpush1.msra.mxu0 0.0
    %121 = vmatprep.subr.mxu0 0.0
    %122 = vmatpush1.msra.mxu0 0.0
    %123 = vmatprep.subr.mxu0 0.0
    %124 = vmatpush1.msra.mxu0 0.0
    %125 = vmatprep.subr.mxu0 0.0
    %126 = vmatpush1.msra.mxu0 0.0
    %127 = vmatprep.subr.mxu0 0.0
    %128 = vmatpush1.msra.mxu0 0.0
    %129 = vmatprep.mubr.f32.mxu0 0.0
    %130 = vmatmul.mubr.f32.gmra.mrb[0].mxu0 %v42
    %v131 = vpop.f32.mrb[0].mxu0
    %v132 = vadd.f32 %v38, %v131
    %v133 = vpop.f32.mrb[0].mxu0
    %134 = vmatprep.mubr.f32.mxu0 0.0
    %135 = vmatmul.mubr.f32.gmra.mrb[0].mxu0 %v45
    %v136 = vpop.f32.mrb[0].mxu0
    %v137 = vadd.f32 %v38, %v136
    %v138 = vpop.f32.mrb[0].mxu0
    %139 = vmatprep.mubr.f32.mxu0 0.0
    %140 = vmatmul.mubr.f32.gmra.mrb[0].mxu0 %v48
    %v141 = vpop.f32.mrb[0].mxu0
    %v142 = vadd.f32 %v38, %v141
    %v143 = vpop.f32.mrb[0].mxu0
    %144 = vmatprep.mubr.f32.mxu0 0.0
    %145 = vmatmul.mubr.f32.gmra.mrb[0].mxu0 %v51
    %v146 = vpop.f32.mrb[0].mxu0
    %v147 = vadd.f32 %v38, %v146
    %v148 = vpop.f32.mrb[0].mxu0
    %149 = vmatprep.mubr.f32.mxu0 0.0
    %150 = vmatmul.mubr.f32.gmra.mrb[0].mxu0 %v54
    %v151 = vpop.f32.mrb[0].mxu0
    %v152 = vadd.f32 %v38, %v151
    %v153 = vpop.f32.mrb[0].mxu0
    %154 = vmatprep.mubr.f32.mxu0 0.0
    %155 = vmatmul.mubr.f32.gmra.mrb[0].mxu0 %v57
    %v156 = vpop.f32.mrb[0].mxu0
    %v157 = vadd.f32 %v38, %v156
    %v158 = vpop.f32.mrb[0].mxu0
    %159 = vmatprep.mubr.f32.mxu0 0.0
    %160 = vmatmul.mubr.f32.gmra.mrb[0].mxu0 %v60
    %v161 = vpop.f32.mrb[0].mxu0
    %v162 = vadd.f32 %v38, %v161
    %v163 = vpop.f32.mrb[0].mxu0
    %164 = vmatprep.mubr.f32.mxu0 0.0
    %165 = vmatmul.mubr.f32.gmra.mrb[0].mxu0 %v63
    %v166 = vpop.f32.mrb[0].mxu0
    %v167 = vadd.f32 %v38, %v166
    %v168 = vpop.f32.mrb[0].mxu0
    %169 = vdwg.mxu0
    %v170 = vmul.f32 %v132, 0.09
    %v171 = vmul.f32 %v137, 0.09
    %v172 = vmul.f32 %v142, 0.09
    %v173 = vmul.f32 %v147, 0.09
    %v174 = vmul.f32 %v152, 0.09
    %v175 = vmul.f32 %v157, 0.09
    %v176 = vmul.f32 %v162, 0.09
    %v177 = vmul.f32 %v167, 0.09
    %v178 = vadd.f32 %v170, 0.5
    %v179 = vadd.f32 %v171, 0.5
    %v180 = vadd.f32 %v172, 0.5
    %v181 = vadd.f32 %v173, 0.5
    %v182 = vadd.f32 %v174, 0.5
    %v183 = vadd.f32 %v175, 0.5
    %v184 = vadd.f32 %v176, 0.5
    %v185 = vadd.f32 %v177, 0.5
    %v186 = vmul.f32 %v132, %v178
    %v187 = vmul.f32 %v137, %v179
    %v188 = vmul.f32 %v142, %v180
    %v189 = vmul.f32 %v147, %v181
    %v190 = vmul.f32 %v152, %v182
    %v191 = vmul.f32 %v157, %v183
    %v192 = vmul.f32 %v162, %v184
    %v193 = vmul.f32 %v167, %v185
    %v194 = vld [vmem:[%s3] sm:$0xff]
    %v195 = vld [vmem:[%s3 + $0x8] sm:$0xff]
    %v196 = vld [vmem:[%s3 + $0x10] sm:$0xff]
    %v197 = vld [vmem:[%s3 + $0x18] sm:$0xff]
    %v198 = vld [vmem:[%s3 + $0x20] sm:$0xff]
    %v199 = vld [vmem:[%s3 + $0x28] sm:$0xff]
    %v200 = vld [vmem:[%s3 + $0x30] sm:$0xff]
    %v201 = vld [vmem:[%s3 + $0x38] sm:$0xff]
    %v202 = vld [vmem:[%s3 + $0x40] sm:$0xff]
    %v203 = vld [vmem:[%s3 + $0x48] sm:$0xff]
    %v204 = vld [vmem:[%s3 + $0x50] sm:$0xff]
    %v205 = vld [vmem:[%s3 + $0x58] sm:$0xff]
    %v206 = vld [vmem:[%s3 + $0x60] sm:$0xff]
    %v207 = vld [vmem:[%s3 + $0x68] sm:$0xff]
    %v208 = vld [vmem:[%s3 + $0x70] sm:$0xff]
    %v209 = vld [vmem:[%s3 + $0x78] sm:$0xff]
    %v210 = vld [vmem:[%s3 + $0x80] sm:$0xff]
    %v211 = vld [vmem:[%s3 + $0x88] sm:$0xff]
    %v212 = vld [vmem:[%s3 + $0x90] sm:$0xff]
    %v213 = vld [vmem:[%s3 + $0x98] sm:$0xff]
    %v214 = vld [vmem:[%s3 + $0xa0] sm:$0xff]
    %v215 = vld [vmem:[%s3 + $0xa8] sm:$0xff]
    %v216 = vld [vmem:[%s3 + $0xb0] sm:$0xff]
    %v217 = vld [vmem:[%s3 + $0xb8] sm:$0xff]
    %v218 = vld [vmem:[%s3 + $0xc0] sm:$0xff]
    %v219 = vld [vmem:[%s3 + $0xc8] sm:$0xff]
    %v220 = vld [vmem:[%s3 + $0xd0] sm:$0xff]
    %v221 = vld [vmem:[%s3 + $0xd8] sm:$0xff]
    %v222 = vld [vmem:[%s3 + $0xe0] sm:$0xff]
    %v223 = vld [vmem:[%s3 + $0xe8] sm:$0xff]
    %v224 = vld [vmem:[%s3 + $0xf0] sm:$0xff]
    %v225 = vld [vmem:[%s3 + $0xf8] sm:$0xff]
    %v226 = vld [vmem:[%s3 + $0x100] sm:$0xff]
    %v227 = vld [vmem:[%s3 + $0x108] sm:$0xff]
    %v228 = vld [vmem:[%s3 + $0x110] sm:$0xff]
    %v229 = vld [vmem:[%s3 + $0x118] sm:$0xff]
    %v230 = vld [vmem:[%s3 + $0x120] sm:$0xff]
    %v231 = vld [vmem:[%s3 + $0x128] sm:$0xff]
    %v232 = vld [vmem:[%s3 + $0x130] sm:$0xff]
    %v233 = vld [vmem:[%s3 + $0x138] sm:$0xff]
    %v234 = vld [vmem:[%s3 + $0x140] sm:$0xff]
    %v235 = vld [vmem:[%s3 + $0x148] sm:$0xff]
    %v236 = vld [vmem:[%s3 + $0x150] sm:$0xff]
    %v237 = vld [vmem:[%s3 + $0x158] sm:$0xff]
    %v238 = vld [vmem:[%s3 + $0x160] sm:$0xff]
    %v239 = vld [vmem:[%s3 + $0x168] sm:$0xff]
    %v240 = vld [vmem:[%s3 + $0x170] sm:$0xff]
    %v241 = vld [vmem:[%s3 + $0x178] sm:$0xff]
    %v242 = vld [vmem:[%s3 + $0x180] sm:$0xff]
    %v243 = vld [vmem:[%s3 + $0x188] sm:$0xff]
    %v244 = vld [vmem:[%s3 + $0x190] sm:$0xff]
    %v245 = vld [vmem:[%s3 + $0x198] sm:$0xff]
    %v246 = vld [vmem:[%s3 + $0x1a0] sm:$0xff]
    %v247 = vld [vmem:[%s3 + $0x1a8] sm:$0xff]
    %v248 = vld [vmem:[%s3 + $0x1b0] sm:$0xff]
    %v249 = vld [vmem:[%s3 + $0x1b8] sm:$0xff]
    %v250 = vld [vmem:[%s3 + $0x1c0] sm:$0xff]
    %v251 = vld [vmem:[%s3 + $0x1c8] sm:$0xff]
    %v252 = vld [vmem:[%s3 + $0x1d0] sm:$0xff]
    %v253 = vld [vmem:[%s3 + $0x1d8] sm:$0xff]
    %v254 = vld [vmem:[%s3 + $0x1e0] sm:$0xff]
    %v255 = vld [vmem:[%s3 + $0x1e8] sm:$0xff]
    %v256 = vld [vmem:[%s3 + $0x1f0] sm:$0xff]
    %v257 = vld [vmem:[%s3 + $0x1f8] sm:$0xff]
    %v258 = vld [vmem:[%s3 + $0x200] sm:$0xff]
    %v259 = vld [vmem:[%s3 + $0x208] sm:$0xff]
    %v260 = vld [vmem:[%s3 + $0x210] sm:$0xff]
    %v261 = vld [vmem:[%s3 + $0x218] sm:$0xff]
    %v262 = vld [vmem:[%s3 + $0x220] sm:$0xff]
    %v263 = vld [vmem:[%s3 + $0x228] sm:$0xff]
    %v264 = vld [vmem:[%s3 + $0x230] sm:$0xff]
    %v265 = vld [vmem:[%s3 + $0x238] sm:$0xff]
    %v266 = vld [vmem:[%s3 + $0x240] sm:$0xff]
    %v267 = vld [vmem:[%s3 + $0x248] sm:$0xff]
    %v268 = vld [vmem:[%s3 + $0x250] sm:$0xff]
    %v269 = vld [vmem:[%s3 + $0x258] sm:$0xff]
    %v270 = vld [vmem:[%s3 + $0x260] sm:$0xff]
    %v271 = vld [vmem:[%s3 + $0x268] sm:$0xff]
    %v272 = vld [vmem:[%s3 + $0x270] sm:$0xff]
    %v273 = vld [vmem:[%s3 + $0x278] sm:$0xff]
    %v274 = vld [vmem:[%s3 + $0x280] sm:$0xff]
    %v275 = vld [vmem:[%s3 + $0x288] sm:$0xff]
    %v276 = vld [vmem:[%s3 + $0x290] sm:$0xff]
    %v277 = vld [vmem:[%s3 + $0x298] sm:$0xff]
    %v278 = vld [vmem:[%s3 + $0x2a0] sm:$0xff]
    %v279 = vld [vmem:[%s3 + $0x2a8] sm:$0xff]
    %v280 = vld [vmem:[%s3 + $0x2b0] sm:$0xff]
    %v281 = vld [vmem:[%s3 + $0x2b8] sm:$0xff]
    %v282 = vld [vmem:[%s3 + $0x2c0] sm:$0xff]
    %v283 = vld [vmem:[%s3 + $0x2c8] sm:$0xff]
    %v284 = vld [vmem:[%s3 + $0x2d0] sm:$0xff]
    %v285 = vld [vmem:[%s3 + $0x2d8] sm:$0xff]
    %v286 = vld [vmem:[%s3 + $0x2e0] sm:$0xff]
    %v287 = vld [vmem:[%s3 + $0x2e8] sm:$0xff]
    %v288 = vld [vmem:[%s3 + $0x2f0] sm:$0xff]
    %v289 = vld [vmem:[%s3 + $0x2f8] sm:$0xff]
    %v290 = vld [vmem:[%s3 + $0x300] sm:$0xff]
    %v291 = vld [vmem:[%s3 + $0x308] sm:$0xff]
    %v292 = vld [vmem:[%s3 + $0x310] sm:$0xff]
    %v293 = vld [vmem:[%s3 + $0x318] sm:$0xff]
    %v294 = vld [vmem:[%s3 + $0x320] sm:$0xff]
    %v295 = vld [vmem:[%s3 + $0x328] sm:$0xff]
    %v296 = vld [vmem:[%s3 + $0x330] sm:$0xff]
    %v297 = vld [vmem:[%s3 + $0x338] sm:$0xff]
    %v298 = vld [vmem:[%s3 + $0x340] sm:$0xff]
    %v299 = vld [vmem:[%s3 + $0x348] sm:$0xff]
    %v300 = vld [vmem:[%s3 + $0x350] sm:$0xff]
    %v301 = vld [vmem:[%s3 + $0x358] sm:$0xff]
    %v302 = vld [vmem:[%s3 + $0x360] sm:$0xff]
    %v303 = vld [vmem:[%s3 + $0x368] sm:$0xff]
    %v304 = vld [vmem:[%s3 + $0x370] sm:$0xff]
    %v305 = vld [vmem:[%s3 + $0x378] sm:$0xff]
    %v306 = vld [vmem:[%s3 + $0x380] sm:$0xff]
    %v307 = vld [vmem:[%s3 + $0x388] sm:$0xff]
    %v308 = vld [vmem:[%s3 + $0x390] sm:$0xff]
    %v309 = vld [vmem:[%s3 + $0x398] sm:$0xff]
    %v310 = vld [vmem:[%s3 + $0x3a0] sm:$0xff]
    %v311 = vld [vmem:[%s3 + $0x3a8] sm:$0xff]
    %v312 = vld [vmem:[%s3 + $0x3b0] sm:$0xff]
    %v313 = vld [vmem:[%s3 + $0x3b8] sm:$0xff]
    %v314 = vld [vmem:[%s3 + $0x3c0] sm:$0xff]
    %v315 = vld [vmem:[%s3 + $0x3c8] sm:$0xff]
    %v316 = vld [vmem:[%s3 + $0x3d0] sm:$0xff]
    %v317 = vld [vmem:[%s3 + $0x3d8] sm:$0xff]
    %v318 = vld [vmem:[%s3 + $0x3e0] sm:$0xff]
    %v319 = vld [vmem:[%s3 + $0x3e8] sm:$0xff]
    %v320 = vld [vmem:[%s3 + $0x3f0] sm:$0xff]
    %v321 = vld [vmem:[%s3 + $0x3f8] sm:$0xff]
    %v322 = vld [vmem:[%s4] sm:$0xff]
    %v324 = vlaneseq
    %v325 = vshrl.u32 %v324, 7
    %v326 = vsub.s32 0, %v325
    %v327 = vrot.slane %v322, %v326
    %v328 = vlaneseq
    %v329 = vshrl.u32 %v328, 7
    %v330 = vsub.s32 1, %v329
    %v331 = vrot.slane %v322, %v330
    %v332 = vlaneseq
    %v333 = vshrl.u32 %v332, 7
    %v334 = vsub.s32 2, %v333
    %v335 = vrot.slane %v322, %v334
    %v336 = vlaneseq
    %v337 = vshrl.u32 %v336, 7
    %v338 = vsub.s32 3, %v337
    %v339 = vrot.slane %v322, %v338
    %v340 = vlaneseq
    %v341 = vshrl.u32 %v340, 7
    %v342 = vsub.s32 4, %v341
    %v343 = vrot.slane %v322, %v342
    %v344 = vlaneseq
    %v345 = vshrl.u32 %v344, 7
    %v346 = vsub.s32 5, %v345
    %v347 = vrot.slane %v322, %v346
    %v348 = vlaneseq
    %v349 = vshrl.u32 %v348, 7
    %v350 = vsub.s32 6, %v349
    %v351 = vrot.slane %v322, %v350
    %v352 = vlaneseq
    %v353 = vshrl.u32 %v352, 7
    %v354 = vsub.s32 7, %v353
    %v355 = vrot.slane %v322, %v354
    %364 = vmatprep.subr.mxu0 %v195
    %365 = vmatpush1.msra.mxu0 %v194
    %366 = vmatprep.subr.mxu0 %v203
    %367 = vmatpush1.msra.mxu0 %v202
    %368 = vmatprep.subr.mxu0 %v211
    %369 = vmatpush1.msra.mxu0 %v210
    %370 = vmatprep.subr.mxu0 %v219
    %371 = vmatpush1.msra.mxu0 %v218
    %372 = vmatprep.subr.mxu0 %v227
    %373 = vmatpush1.msra.mxu0 %v226
    %374 = vmatprep.subr.mxu0 %v235
    %375 = vmatpush1.msra.mxu0 %v234
    %376 = vmatprep.subr.mxu0 %v243
    %377 = vmatpush1.msra.mxu0 %v242
    %378 = vmatprep.subr.mxu0 %v251
    %379 = vmatpush1.msra.mxu0 %v250
    %380 = vmatprep.subr.mxu0 %v259
    %381 = vmatpush1.msra.mxu0 %v258
    %382 = vmatprep.subr.mxu0 %v267
    %383 = vmatpush1.msra.mxu0 %v266
    %384 = vmatprep.subr.mxu0 %v275
    %385 = vmatpush1.msra.mxu0 %v274
    %386 = vmatprep.subr.mxu0 %v283
    %387 = vmatpush1.msra.mxu0 %v282
    %388 = vmatprep.subr.mxu0 %v291
    %389 = vmatpush1.msra.mxu0 %v290
    %390 = vmatprep.subr.mxu0 %v299
    %391 = vmatpush1.msra.mxu0 %v298
    %392 = vmatprep.subr.mxu0 %v307
    %393 = vmatpush1.msra.mxu0 %v306
    %394 = vmatprep.subr.mxu0 %v315
    %395 = vmatpush1.msra.mxu0 %v314
    %396 = vmatprep.subr.mxu0 0.0
    %397 = vmatpush1.msra.mxu0 0.0
    %398 = vmatprep.subr.mxu0 0.0
    %399 = vmatpush1.msra.mxu0 0.0
    %400 = vmatprep.subr.mxu0 0.0
    %401 = vmatpush1.msra.mxu0 0.0
    %402 = vmatprep.subr.mxu0 0.0
    %403 = vmatpush1.msra.mxu0 0.0
    %404 = vmatprep.subr.mxu0 0.0
    %405 = vmatpush1.msra.mxu0 0.0
    %406 = vmatprep.subr.mxu0 0.0
    %407 = vmatpush1.msra.mxu0 0.0
    %408 = vmatprep.subr.mxu0 0.0
    %409 = vmatpush1.msra.mxu0 0.0
    %410 = vmatprep.subr.mxu0 0.0
    %411 = vmatpush1.msra.mxu0 0.0
    %412 = vmatprep.subr.mxu0 0.0
    %413 = vmatpush1.msra.mxu0 0.0
    %414 = vmatprep.subr.mxu0 0.0
    %415 = vmatpush1.msra.mxu0 0.0
    %416 = vmatprep.subr.mxu0 0.0
    %417 = vmatpush1.msra.mxu0 0.0
    %418 = vmatprep.subr.mxu0 0.0
    %419 = vmatpush1.msra.mxu0 0.0
    %420 = vmatprep.subr.mxu0 0.0
    %421 = vmatpush1.msra.mxu0 0.0
    %422 = vmatprep.subr.mxu0 0.0
    %423 = vmatpush1.msra.mxu0 0.0
    %424 = vmatprep.subr.mxu0 0.0
    %425 = vmatpush1.msra.mxu0 0.0
    %426 = vmatprep.subr.mxu0 0.0
    %427 = vmatpush1.msra.mxu0 0.0
    %428 = vmatprep.mubr.f32.mxu0 0.0
    %429 = vmatmul.mubr.f32.gmra.mrb[0].mxu0 %v186
    %v430 = vpop.f32.mrb[0].mxu0
    %v431 = vadd.f32 %v327, %v430
    %v432 = vpop.f32.mrb[0].mxu0
    %v433 = vadd.f32 %v331, %v432
    %434 = vmatprep.mubr.f32.mxu0 0.0
    %435 = vmatmul.mubr.f32.gmra.mrb[0].mxu0 %v187
    %v436 = vpop.f32.mrb[0].mxu0
    %v437 = vadd.f32 %v327, %v436
    %v438 = vpop.f32.mrb[0].mxu0
    %v439 = vadd.f32 %v331, %v438
    %440 = vmatprep.mubr.f32.mxu0 0.0
    %441 = vmatmul.mubr.f32.gmra.mrb[0].mxu0 %v188
    %v442 = vpop.f32.mrb[0].mxu0
    %v443 = vadd.f32 %v327, %v442
    %v444 = vpop.f32.mrb[0].mxu0
    %v445 = vadd.f32 %v331, %v444
    %446 = vmatprep.mubr.f32.mxu0 0.0
    %447 = vmatmul.mubr.f32.gmra.mrb[0].mxu0 %v189
    %v448 = vpop.f32.mrb[0].mxu0
    %v449 = vadd.f32 %v327, %v448
    %v450 = vpop.f32.mrb[0].mxu0
    %v451 = vadd.f32 %v331, %v450
    %452 = vmatprep.mubr.f32.mxu0 0.0
    %453 = vmatmul.mubr.f32.gmra.mrb[0].mxu0 %v190
    %v454 = vpop.f32.mrb[0].mxu0
    %v455 = vadd.f32 %v327, %v454
    %v456 = vpop.f32.mrb[0].mxu0
    %v457 = vadd.f32 %v331, %v456
    %458 = vmatprep.mubr.f32.mxu0 0.0
    %459 = vmatmul.mubr.f32.gmra.mrb[0].mxu0 %v191
    %v460 = vpop.f32.mrb[0].mxu0
    %v461 = vadd.f32 %v327, %v460
    %v462 = vpop.f32.mrb[0].mxu0
    %v463 = vadd.f32 %v331, %v462
    %464 = vmatprep.mubr.f32.mxu0 0.0
    %465 = vmatmul.mubr.f32.gmra.mrb[0].mxu0 %v192
    %v466 = vpop.f32.mrb[0].mxu0
    %v467 = vadd.f32 %v327, %v466
    %v468 = vpop.f32.mrb[0].mxu0
    %v469 = vadd.f32 %v331, %v468
    %470 = vmatprep.mubr.f32.mxu0 0.0
    %471 = vmatmul.mubr.f32.gmra.mrb[0].mxu0 %v193
    %v472 = vpop.f32.mrb[0].mxu0
    %v473 = vadd.f32 %v327, %v472
    %v474 = vpop.f32.mrb[0].mxu0
    %v475 = vadd.f32 %v331, %v474
    %476 = vdwg.mxu0
    %477 = vmatprep.subr.mxu0 %v197
    %478 = vmatpush1.msra.mxu0 %v196
    %479 = vmatprep.subr.mxu0 %v205
    %480 = vmatpush1.msra.mxu0 %v204
    %481 = vmatprep.subr.mxu0 %v213
    %482 = vmatpush1.msra.mxu0 %v212
    %483 = vmatprep.subr.mxu0 %v221
    %484 = vmatpush1.msra.mxu0 %v220
    %485 = vmatprep.subr.mxu0 %v229
    %486 = vmatpush1.msra.mxu0 %v228
    %487 = vmatprep.subr.mxu0 %v237
    %488 = vmatpush1.msra.mxu0 %v236
    %489 = vmatprep.subr.mxu0 %v245
    %490 = vmatpush1.msra.mxu0 %v244
    %491 = vmatprep.subr.mxu0 %v253
    %492 = vmatpush1.msra.mxu0 %v252
    %493 = vmatprep.subr.mxu0 %v261
    %494 = vmatpush1.msra.mxu0 %v260
    %495 = vmatprep.subr.mxu0 %v269
    %496 = vmatpush1.msra.mxu0 %v268
    %497 = vmatprep.subr.mxu0 %v277
    %498 = vmatpush1.msra.mxu0 %v276
    %499 = vmatprep.subr.mxu0 %v285
    %500 = vmatpush1.msra.mxu0 %v284
    %501 = vmatprep.subr.mxu0 %v293
    %502 = vmatpush1.msra.mxu0 %v292
    %503 = vmatprep.subr.mxu0 %v301
    %504 = vmatpush1.msra.mxu0 %v300
    %505 = vmatprep.subr.mxu0 %v309
    %506 = vmatpush1.msra.mxu0 %v308
    %507 = vmatprep.subr.mxu0 %v317
    %508 = vmatpush1.msra.mxu0 %v316
    %509 = vmatprep.subr.mxu0 0.0
    %510 = vmatpush1.msra.mxu0 0.0
    %511 = vmatprep.subr.mxu0 0.0
    %512 = vmatpush1.msra.mxu0 0.0
    %513 = vmatprep.subr.mxu0 0.0
    %514 = vmatpush1.msra.mxu0 0.0
    %515 = vmatprep.subr.mxu0 0.0
    %516 = vmatpush1.msra.mxu0 0.0
    %517 = vmatprep.subr.mxu0 0.0
    %518 = vmatpush1.msra.mxu0 0.0
    %519 = vmatprep.subr.mxu0 0.0
    %520 = vmatpush1.msra.mxu0 0.0
    %521 = vmatprep.subr.mxu0 0.0
    %522 = vmatpush1.msra.mxu0 0.0
    %523 = vmatprep.subr.mxu0 0.0
    %524 = vmatpush1.msra.mxu0 0.0
    %525 = vmatprep.subr.mxu0 0.0
    %526 = vmatpush1.msra.mxu0 0.0
    %527 = vmatprep.subr.mxu0 0.0
    %528 = vmatpush1.msra.mxu0 0.0
    %529 = vmatprep.subr.mxu0 0.0
    %530 = vmatpush1.msra.mxu0 0.0
    %531 = vmatprep.subr.mxu0 0.0
    %532 = vmatpush1.msra.mxu0 0.0
    %533 = vmatprep.subr.mxu0 0.0
    %534 = vmatpush1.msra.mxu0 0.0
    %535 = vmatprep.subr.mxu0 0.0
    %536 = vmatpush1.msra.mxu0 0.0
    %537 = vmatprep.subr.mxu0 0.0
    %538 = vmatpush1.msra.mxu0 0.0
    %539 = vmatprep.subr.mxu0 0.0
    %540 = vmatpush1.msra.mxu0 0.0
    %541 = vmatprep.mubr.f32.mxu0 0.0
    %542 = vmatmul.mubr.f32.gmra.mrb[0].mxu0 %v186
    %v543 = vpop.f32.mrb[0].mxu0
    %v544 = vadd.f32 %v335, %v543
    %v545 = vpop.f32.mrb[0].mxu0
    %v546 = vadd.f32 %v339, %v545
    %547 = vmatprep.mubr.f32.mxu0 0.0
    %548 = vmatmul.mubr.f32.gmra.mrb[0].mxu0 %v187
    %v549 = vpop.f32.mrb[0].mxu0
    %v550 = vadd.f32 %v335, %v549
    %v551 = vpop.f32.mrb[0].mxu0
    %v552 = vadd.f32 %v339, %v551
    %553 = vmatprep.mubr.f32.mxu0 0.0
    %554 = vmatmul.mubr.f32.gmra.mrb[0].mxu0 %v188
    %v555 = vpop.f32.mrb[0].mxu0
    %v556 = vadd.f32 %v335, %v555
    %v557 = vpop.f32.mrb[0].mxu0
    %v558 = vadd.f32 %v339, %v557
    %559 = vmatprep.mubr.f32.mxu0 0.0
    %560 = vmatmul.mubr.f32.gmra.mrb[0].mxu0 %v189
    %v561 = vpop.f32.mrb[0].mxu0
    %v562 = vadd.f32 %v335, %v561
    %v563 = vpop.f32.mrb[0].mxu0
    %v564 = vadd.f32 %v339, %v563
    %565 = vmatprep.mubr.f32.mxu0 0.0
    %566 = vmatmul.mubr.f32.gmra.mrb[0].mxu0 %v190
    %v567 = vpop.f32.mrb[0].mxu0
    %v568 = vadd.f32 %v335, %v567
    %v569 = vpop.f32.mrb[0].mxu0
    %v570 = vadd.f32 %v339, %v569
    %571 = vmatprep.mubr.f32.mxu0 0.0
    %572 = vmatmul.mubr.f32.gmra.mrb[0].mxu0 %v191
    %v573 = vpop.f32.mrb[0].mxu0
    %v574 = vadd.f32 %v335, %v573
    %v575 = vpop.f32.mrb[0].mxu0
    %v576 = vadd.f32 %v339, %v575
    %577 = vmatprep.mubr.f32.mxu0 0.0
    %578 = vmatmul.mubr.f32.gmra.mrb[0].mxu0 %v192
    %v579 = vpop.f32.mrb[0].mxu0
    %v580 = vadd.f32 %v335, %v579
    %v581 = vpop.f32.mrb[0].mxu0
    %v582 = vadd.f32 %v339, %v581
    %583 = vmatprep.mubr.f32.mxu0 0.0
    %584 = vmatmul.mubr.f32.gmra.mrb[0].mxu0 %v193
    %v585 = vpop.f32.mrb[0].mxu0
    %v586 = vadd.f32 %v335, %v585
    %v587 = vpop.f32.mrb[0].mxu0
    %v588 = vadd.f32 %v339, %v587
    %589 = vdwg.mxu0
    %590 = vmatprep.subr.mxu0 %v199
    %591 = vmatpush1.msra.mxu0 %v198
    %592 = vmatprep.subr.mxu0 %v207
    %593 = vmatpush1.msra.mxu0 %v206
    %594 = vmatprep.subr.mxu0 %v215
    %595 = vmatpush1.msra.mxu0 %v214
    %596 = vmatprep.subr.mxu0 %v223
    %597 = vmatpush1.msra.mxu0 %v222
    %598 = vmatprep.subr.mxu0 %v231
    %599 = vmatpush1.msra.mxu0 %v230
    %600 = vmatprep.subr.mxu0 %v239
    %601 = vmatpush1.msra.mxu0 %v238
    %602 = vmatprep.subr.mxu0 %v247
    %603 = vmatpush1.msra.mxu0 %v246
    %604 = vmatprep.subr.mxu0 %v255
    %605 = vmatpush1.msra.mxu0 %v254
    %606 = vmatprep.subr.mxu0 %v263
    %607 = vmatpush1.msra.mxu0 %v262
    %608 = vmatprep.subr.mxu0 %v271
    %609 = vmatpush1.msra.mxu0 %v270
    %610 = vmatprep.subr.mxu0 %v279
    %611 = vmatpush1.msra.mxu0 %v278
    %612 = vmatprep.subr.mxu0 %v287
    %613 = vmatpush1.msra.mxu0 %v286
    %614 = vmatprep.subr.mxu0 %v295
    %615 = vmatpush1.msra.mxu0 %v294
    %616 = vmatprep.subr.mxu0 %v303
    %617 = vmatpush1.msra.mxu0 %v302
    %618 = vmatprep.subr.mxu0 %v311
    %619 = vmatpush1.msra.mxu0 %v310
    %620 = vmatprep.subr.mxu0 %v319
    %621 = vmatpush1.msra.mxu0 %v318
    %622 = vmatprep.subr.mxu0 0.0
    %623 = vmatpush1.msra.mxu0 0.0
    %624 = vmatprep.subr.mxu0 0.0
    %625 = vmatpush1.msra.mxu0 0.0
    %626 = vmatprep.subr.mxu0 0.0
    %627 = vmatpush1.msra.mxu0 0.0
    %628 = vmatprep.subr.mxu0 0.0
    %629 = vmatpush1.msra.mxu0 0.0
    %630 = vmatprep.subr.mxu0 0.0
    %631 = vmatpush1.msra.mxu0 0.0
    %632 = vmatprep.subr.mxu0 0.0
    %633 = vmatpush1.msra.mxu0 0.0
    %634 = vmatprep.subr.mxu0 0.0
    %635 = vmatpush1.msra.mxu0 0.0
    %636 = vmatprep.subr.mxu0 0.0
    %637 = vmatpush1.msra.mxu0 0.0
    %638 = vmatprep.subr.mxu0 0.0
    %639 = vmatpush1.msra.mxu0 0.0
    %640 = vmatprep.subr.mxu0 0.0
    %641 = vmatpush1.msra.mxu0 0.0
    %642 = vmatprep.subr.mxu0 0.0
    %643 = vmatpush1.msra.mxu0 0.0
    %644 = vmatprep.subr.mxu0 0.0
    %645 = vmatpush1.msra.mxu0 0.0
    %646 = vmatprep.subr.mxu0 0.0
    %647 = vmatpush1.msra.mxu0 0.0
    %648 = vmatprep.subr.mxu0 0.0
    %649 = vmatpush1.msra.mxu0 0.0
    %650 = vmatprep.subr.mxu0 0.0
    %651 = vmatpush1.msra.mxu0 0.0
    %652 = vmatprep.subr.mxu0 0.0
    %653 = vmatpush1.msra.mxu0 0.0
    %654 = vmatprep.mubr.f32.mxu0 0.0
    %655 = vmatmul.mubr.f32.gmra.mrb[0].mxu0 %v186
    %v656 = vpop.f32.mrb[0].mxu0
    %v657 = vadd.f32 %v343, %v656
    %v658 = vpop.f32.mrb[0].mxu0
    %v659 = vadd.f32 %v347, %v658
    %660 = vmatprep.mubr.f32.mxu0 0.0
    %661 = vmatmul.mubr.f32.gmra.mrb[0].mxu0 %v187
    %v662 = vpop.f32.mrb[0].mxu0
    %v663 = vadd.f32 %v343, %v662
    %v664 = vpop.f32.mrb[0].mxu0
    %v665 = vadd.f32 %v347, %v664
    %666 = vmatprep.mubr.f32.mxu0 0.0
    %667 = vmatmul.mubr.f32.gmra.mrb[0].mxu0 %v188
    %v668 = vpop.f32.mrb[0].mxu0
    %v669 = vadd.f32 %v343, %v668
    %v670 = vpop.f32.mrb[0].mxu0
    %v671 = vadd.f32 %v347, %v670
    %672 = vmatprep.mubr.f32.mxu0 0.0
    %673 = vmatmul.mubr.f32.gmra.mrb[0].mxu0 %v189
    %v674 = vpop.f32.mrb[0].mxu0
    %v675 = vadd.f32 %v343, %v674
    %v676 = vpop.f32.mrb[0].mxu0
    %v677 = vadd.f32 %v347, %v676
    %678 = vmatprep.mubr.f32.mxu0 0.0
    %679 = vmatmul.mubr.f32.gmra.mrb[0].mxu0 %v190
    %v680 = vpop.f32.mrb[0].mxu0
    %v681 = vadd.f32 %v343, %v680
    %v682 = vpop.f32.mrb[0].mxu0
    %v683 = vadd.f32 %v347, %v682
    %684 = vmatprep.mubr.f32.mxu0 0.0
    %685 = vmatmul.mubr.f32.gmra.mrb[0].mxu0 %v191
    %v686 = vpop.f32.mrb[0].mxu0
    %v687 = vadd.f32 %v343, %v686
    %v688 = vpop.f32.mrb[0].mxu0
    %v689 = vadd.f32 %v347, %v688
    %690 = vmatprep.mubr.f32.mxu0 0.0
    %691 = vmatmul.mubr.f32.gmra.mrb[0].mxu0 %v192
    %v692 = vpop.f32.mrb[0].mxu0
    %v693 = vadd.f32 %v343, %v692
    %v694 = vpop.f32.mrb[0].mxu0
    %v695 = vadd.f32 %v347, %v694
    %696 = vmatprep.mubr.f32.mxu0 0.0
    %697 = vmatmul.mubr.f32.gmra.mrb[0].mxu0 %v193
    %v698 = vpop.f32.mrb[0].mxu0
    %v699 = vadd.f32 %v343, %v698
    %v700 = vpop.f32.mrb[0].mxu0
    %v701 = vadd.f32 %v347, %v700
    %702 = vdwg.mxu0
    %703 = vmatprep.subr.mxu0 %v201
    %704 = vmatpush1.msra.mxu0 %v200
    %705 = vmatprep.subr.mxu0 %v209
    %706 = vmatpush1.msra.mxu0 %v208
    %707 = vmatprep.subr.mxu0 %v217
    %708 = vmatpush1.msra.mxu0 %v216
    %709 = vmatprep.subr.mxu0 %v225
    %710 = vmatpush1.msra.mxu0 %v224
    %711 = vmatprep.subr.mxu0 %v233
    %712 = vmatpush1.msra.mxu0 %v232
    %713 = vmatprep.subr.mxu0 %v241
    %714 = vmatpush1.msra.mxu0 %v240
    %715 = vmatprep.subr.mxu0 %v249
    %716 = vmatpush1.msra.mxu0 %v248
    %717 = vmatprep.subr.mxu0 %v257
    %718 = vmatpush1.msra.mxu0 %v256
    %719 = vmatprep.subr.mxu0 %v265
    %720 = vmatpush1.msra.mxu0 %v264
    %721 = vmatprep.subr.mxu0 %v273
    %722 = vmatpush1.msra.mxu0 %v272
    %723 = vmatprep.subr.mxu0 %v281
    %724 = vmatpush1.msra.mxu0 %v280
    %725 = vmatprep.subr.mxu0 %v289
    %726 = vmatpush1.msra.mxu0 %v288
    %727 = vmatprep.subr.mxu0 %v297
    %728 = vmatpush1.msra.mxu0 %v296
    %729 = vmatprep.subr.mxu0 %v305
    %730 = vmatpush1.msra.mxu0 %v304
    %731 = vmatprep.subr.mxu0 %v313
    %732 = vmatpush1.msra.mxu0 %v312
    %733 = vmatprep.subr.mxu0 %v321
    %734 = vmatpush1.msra.mxu0 %v320
    %735 = vmatprep.subr.mxu0 0.0
    %736 = vmatpush1.msra.mxu0 0.0
    %737 = vmatprep.subr.mxu0 0.0
    %738 = vmatpush1.msra.mxu0 0.0
    %739 = vmatprep.subr.mxu0 0.0
    %740 = vmatpush1.msra.mxu0 0.0
    %741 = vmatprep.subr.mxu0 0.0
    %742 = vmatpush1.msra.mxu0 0.0
    %743 = vmatprep.subr.mxu0 0.0
    %744 = vmatpush1.msra.mxu0 0.0
    %745 = vmatprep.subr.mxu0 0.0
    %746 = vmatpush1.msra.mxu0 0.0
    %747 = vmatprep.subr.mxu0 0.0
    %748 = vmatpush1.msra.mxu0 0.0
    %749 = vmatprep.subr.mxu0 0.0
    %750 = vmatpush1.msra.mxu0 0.0
    %751 = vmatprep.subr.mxu0 0.0
    %752 = vmatpush1.msra.mxu0 0.0
    %753 = vmatprep.subr.mxu0 0.0
    %754 = vmatpush1.msra.mxu0 0.0
    %755 = vmatprep.subr.mxu0 0.0
    %756 = vmatpush1.msra.mxu0 0.0
    %757 = vmatprep.subr.mxu0 0.0
    %758 = vmatpush1.msra.mxu0 0.0
    %759 = vmatprep.subr.mxu0 0.0
    %760 = vmatpush1.msra.mxu0 0.0
    %761 = vmatprep.subr.mxu0 0.0
    %762 = vmatpush1.msra.mxu0 0.0
    %763 = vmatprep.subr.mxu0 0.0
    %764 = vmatpush1.msra.mxu0 0.0
    %765 = vmatprep.subr.mxu0 0.0
    %766 = vmatpush1.msra.mxu0 0.0
    %767 = vmatprep.mubr.f32.mxu0 0.0
    %768 = vmatmul.mubr.f32.gmra.mrb[0].mxu0 %v186
    %v769 = vpop.f32.mrb[0].mxu0
    %v770 = vadd.f32 %v351, %v769
    %v771 = vpop.f32.mrb[0].mxu0
    %v772 = vadd.f32 %v355, %v771
    %773 = vmatprep.mubr.f32.mxu0 0.0
    %774 = vmatmul.mubr.f32.gmra.mrb[0].mxu0 %v187
    %v775 = vpop.f32.mrb[0].mxu0
    %v776 = vadd.f32 %v351, %v775
    %v777 = vpop.f32.mrb[0].mxu0
    %v778 = vadd.f32 %v355, %v777
    %779 = vmatprep.mubr.f32.mxu0 0.0
    %780 = vmatmul.mubr.f32.gmra.mrb[0].mxu0 %v188
    %v781 = vpop.f32.mrb[0].mxu0
    %v782 = vadd.f32 %v351, %v781
    %v783 = vpop.f32.mrb[0].mxu0
    %v784 = vadd.f32 %v355, %v783
    %785 = vmatprep.mubr.f32.mxu0 0.0
    %786 = vmatmul.mubr.f32.gmra.mrb[0].mxu0 %v189
    %v787 = vpop.f32.mrb[0].mxu0
    %v788 = vadd.f32 %v351, %v787
    %v789 = vpop.f32.mrb[0].mxu0
    %v790 = vadd.f32 %v355, %v789
    %791 = vmatprep.mubr.f32.mxu0 0.0
    %792 = vmatmul.mubr.f32.gmra.mrb[0].mxu0 %v190
    %v793 = vpop.f32.mrb[0].mxu0
    %v794 = vadd.f32 %v351, %v793
    %v795 = vpop.f32.mrb[0].mxu0
    %v796 = vadd.f32 %v355, %v795
    %797 = vmatprep.mubr.f32.mxu0 0.0
    %798 = vmatmul.mubr.f32.gmra.mrb[0].mxu0 %v191
    %v799 = vpop.f32.mrb[0].mxu0
    %v800 = vadd.f32 %v351, %v799
    %v801 = vpop.f32.mrb[0].mxu0
    %v802 = vadd.f32 %v355, %v801
    %803 = vmatprep.mubr.f32.mxu0 0.0
    %804 = vmatmul.mubr.f32.gmra.mrb[0].mxu0 %v192
    %v805 = vpop.f32.mrb[0].mxu0
    %v806 = vadd.f32 %v351, %v805
    %v807 = vpop.f32.mrb[0].mxu0
    %v808 = vadd.f32 %v355, %v807
    %809 = vmatprep.mubr.f32.mxu0 0.0
    %810 = vmatmul.mubr.f32.gmra.mrb[0].mxu0 %v193
    %v811 = vpop.f32.mrb[0].mxu0
    %v812 = vadd.f32 %v351, %v811
    %v813 = vpop.f32.mrb[0].mxu0
    %v814 = vadd.f32 %v355, %v813
    %815 = vdwg.mxu0
    %816 = vst [vmem:[#allocation2] sm:$0xff] %v431
    %817 = vst [vmem:[#allocation2 + $0x8] sm:$0xff] %v433
    %818 = vst [vmem:[#allocation2 + $0x10] sm:$0xff] %v544
    %819 = vst [vmem:[#allocation2 + $0x18] sm:$0xff] %v546
    %820 = vst [vmem:[#allocation2 + $0x20] sm:$0xff] %v657
    %821 = vst [vmem:[#allocation2 + $0x28] sm:$0xff] %v659
    %822 = vst [vmem:[#allocation2 + $0x30] sm:$0xff] %v770
    %vm823 = vcmask 850944
    %824 = vst.msk [vmem:[#allocation2 + $0x38] sm:$0xff] %vm823, %v772
    %825 = vst [vmem:[#allocation2 + $0x40] sm:$0xff] %v437
    %826 = vst [vmem:[#allocation2 + $0x48] sm:$0xff] %v439
    %827 = vst [vmem:[#allocation2 + $0x50] sm:$0xff] %v550
    %828 = vst [vmem:[#allocation2 + $0x58] sm:$0xff] %v552
    %829 = vst [vmem:[#allocation2 + $0x60] sm:$0xff] %v663
    %830 = vst [vmem:[#allocation2 + $0x68] sm:$0xff] %v665
    %831 = vst [vmem:[#allocation2 + $0x70] sm:$0xff] %v776
    %832 = vst.msk [vmem:[#allocation2 + $0x78] sm:$0xff] %vm823, %v778
    %833 = vst [vmem:[#allocation2 + $0x80] sm:$0xff] %v443
    %834 = vst [vmem:[#allocation2 + $0x88] sm:$0xff] %v445
    %835 = vst [vmem:[#allocation2 + $0x90] sm:$0xff] %v556
    %836 = vst [vmem:[#allocation2 + $0x98] sm:$0xff] %v558
    %837 = vst [vmem:[#allocation2 + $0xa0] sm:$0xff] %v669
    %838 = vst [vmem:[#allocation2 + $0xa8] sm:$0xff] %v671
    %839 = vst [vmem:[#allocation2 + $0xb0] sm:$0xff] %v782
    %840 = vst.msk [vmem:[#allocation2 + $0xb8] sm:$0xff] %vm823, %v784
    %841 = vst [vmem:[#allocation2 + $0xc0] sm:$0xff] %v449
    %842 = vst [vmem:[#allocation2 + $0xc8] sm:$0xff] %v451
    %843 = vst [vmem:[#allocation2 + $0xd0] sm:$0xff] %v562
    %844 = vst [vmem:[#allocation2 + $0xd8] sm:$0xff] %v564
    %845 = vst [vmem:[#allocation2 + $0xe0] sm:$0xff] %v675
    %846 = vst [vmem:[#allocation2 + $0xe8] sm:$0xff] %v677
    %847 = vst [vmem:[#allocation2 + $0xf0] sm:$0xff] %v788
    %848 = vst.msk [vmem:[#allocation2 + $0xf8] sm:$0xff] %vm823, %v790
    %849 = vst [vmem:[#allocation2 + $0x100] sm:$0xff] %v455
    %850 = vst [vmem:[#allocation2 + $0x108] sm:$0xff] %v457
    %851 = vst [vmem:[#allocation2 + $0x110] sm:$0xff] %v568
    %852 = vst [vmem:[#allocation2 + $0x118] sm:$0xff] %v570
    %853 = vst [vmem:[#allocation2 + $0x120] sm:$0xff] %v681
    %854 = vst [vmem:[#allocation2 + $0x128] sm:$0xff] %v683
    %855 = vst [vmem:[#allocation2 + $0x130] sm:$0xff] %v794
    %856 = vst.msk [vmem:[#allocation2 + $0x138] sm:$0xff] %vm823, %v796
    %857 = vst [vmem:[#allocation2 + $0x140] sm:$0xff] %v461
    %858 = vst [vmem:[#allocation2 + $0x148] sm:$0xff] %v463
    %859 = vst [vmem:[#allocation2 + $0x150] sm:$0xff] %v574
    %860 = vst [vmem:[#allocation2 + $0x158] sm:$0xff] %v576
    %861 = vst [vmem:[#allocation2 + $0x160] sm:$0xff] %v687
    %862 = vst [vmem:[#allocation2 + $0x168] sm:$0xff] %v689
    %863 = vst [vmem:[#allocation2 + $0x170] sm:$0xff] %v800
    %864 = vst.msk [vmem:[#allocation2 + $0x178] sm:$0xff] %vm823, %v802
    %865 = vst [vmem:[#allocation2 + $0x180] sm:$0xff] %v467
    %866 = vst [vmem:[#allocation2 + $0x188] sm:$0xff] %v469
    %867 = vst [vmem:[#allocation2 + $0x190] sm:$0xff] %v580
    %868 = vst [vmem:[#allocation2 + $0x198] sm:$0xff] %v582
    %869 = vst [vmem:[#allocation2 + $0x1a0] sm:$0xff] %v693
    %870 = vst [vmem:[#allocation2 + $0x1a8] sm:$0xff] %v695
    %871 = vst [vmem:[#allocation2 + $0x1b0] sm:$0xff] %v806
    %872 = vst.msk [vmem:[#allocation2 + $0x1b8] sm:$0xff] %vm823, %v808
    %873 = vst [vmem:[#allocation2 + $0x1c0] sm:$0xff] %v473
    %874 = vst [vmem:[#allocation2 + $0x1c8] sm:$0xff] %v475
    %875 = vst [vmem:[#allocation2 + $0x1d0] sm:$0xff] %v586
    %876 = vst [vmem:[#allocation2 + $0x1d8] sm:$0xff] %v588
    %877 = vst [vmem:[#allocation2 + $0x1e0] sm:$0xff] %v699
    %878 = vst [vmem:[#allocation2 + $0x1e8] sm:$0xff] %v701
    %879 = vst [vmem:[#allocation2 + $0x1f0] sm:$0xff] %v812
    %880 = vst.msk [vmem:[#allocation2 + $0x1f8] sm:$0xff] %vm823, %v814
    // Predicated region
    $region22: #{classifier_scale_apply.1} parent=1 // pred_check
      _
    $region23: #{classifier_scale_apply.1} parent=1 // pred_check_branch
      %882 = sbr.rel (0) target = $region25
    $region24: #{classifier_scale_apply.1} parent=1 // pred_region
      %s884 = ssub.s32 8192, 8192
      %885 = vsyncadd [#allocation3], %s884
      %s886 = sshll.u32 [#allocation2], 4
      %s887 = int_to_ptr.vmem [resolvable:$true] %s886
      %892 = dma.vmem_to_hbm [thread:$0]  %s887, 8192, %s5, [#allocation3], 1024, 1024, 64
    $region25: #{classifier_scale_apply.1} parent=1 // pred_fallthru
      _
    // Predicated region
    $region26: #{classifier_scale_apply.1} parent=1 // pred_check
      _
    $region27: #{classifier_scale_apply.1} parent=1 // pred_check_branch
      %894 = sbr.rel (0) target = $region29
    $region28: #{classifier_scale_apply.1} parent=1 // pred_region
      %895 = dma.done [#allocation3], 8192
    $region29: #{classifier_scale_apply.1} parent=1 // pred_fallthru
      _
    %896 = vsyncpa [#allocation3], 1

</llo_original>
